<compile_context>
chip_gen: v7x
topology: tpu7x:2x2x1
jax: 0.10.0
libtpu: 0.0.40
codegen_flags: <defaults>
</compile_context>

<pallas_src>
import functools

import jax
import jax.numpy as jnp
from jax.experimental import pallas as pl
from jax.experimental.pallas import tpu as pltpu


def _ceil_div(a, b):
    return -(-a // b)


def _loss_kernel(s_ref, t_ref, lbl_ref, out_ref, *, ignore_index):
    s = s_ref[0].astype(jnp.float32)          # (C, TILE_N) student logits
    t = t_ref[0].astype(jnp.float32)          # (C, TILE_N) teacher logits
    lbl = lbl_ref[0]                          # (1, TILE_N) int32 labels

    # student log-softmax over classes (sublane axis 0)
    s_sh = s - jnp.max(s, axis=0, keepdims=True)
    sum_s = jnp.sum(jnp.exp(s_sh), axis=0, keepdims=True)       # (1, TILE_N)
    log_s = s_sh - jnp.log(sum_s)                               # (C, TILE_N)

    # teacher softmax / log-softmax via lse: one big exp, per-column log + recip
    t_sh = t - jnp.max(t, axis=0, keepdims=True)
    t_exp = jnp.exp(t_sh)
    sum_t = jnp.sum(t_exp, axis=0, keepdims=True)               # (1, TILE_N)
    p_t = t_exp * pl.reciprocal(sum_t, approx=True)             # (C, TILE_N)
    log_t = t_sh - jnp.log(sum_t)                               # (C, TILE_N)

    ign = lbl == ignore_index                                   # (1, TILE_N)
    cls = jax.lax.broadcasted_iota(jnp.int32, s.shape, 0)       # class id per sublane
    onehot = cls == lbl                                         # (C, TILE_N)

    ce = jnp.where(onehot, -log_s, 0.0)      # supervised CE element (sum reduction)
    # KL element; log_t is finite even when p_t underflows to 0, so 0 * finite = 0
    # (matches PyTorch KLDivLoss' 0*log(0)=0 convention without an extra where).
    kl = p_t * (log_t - log_s)
    contrib = jnp.where(ign, kl, ce)         # labeled -> CE, unlabeled -> KL

    # lane-dense per-tile partial, reduced over the class (sublane) axis only
    out_ref[...] = jnp.sum(contrib, axis=0, keepdims=True)[None, None]


def partial_consistency_loss(student, teacher, labels, *, ignore_index=0, tile_n=8192):
    """student, teacher: (B, C, N) float; labels: (B, N) int. Returns scalar f32."""
    B, C, N = student.shape
    assert teacher.shape == (B, C, N) and labels.shape == (B, N)

    # Tile the point axis: as few tiles as possible (<= ~tile_n points each),
    # lane-aligned (multiple of 128).  Padding (zero logits + ignore_index labels)
    # contributes exactly 0 to both loss terms.
    n_tiles = max(1, _ceil_div(N, tile_n))
    tile = _ceil_div(_ceil_div(N, n_tiles), 128) * 128
    n_pad = n_tiles * tile
    if n_pad != N:
        pad = n_pad - N
        student = jnp.pad(student, ((0, 0), (0, 0), (0, pad)))
        teacher = jnp.pad(teacher, ((0, 0), (0, 0), (0, pad)))
        labels = jnp.pad(labels, ((0, 0), (0, pad)), constant_values=ignore_index)
    lbl3 = labels.reshape(B, 1, n_pad).astype(jnp.int32)

    kernel = functools.partial(_loss_kernel, ignore_index=ignore_index)

    elems = B * C * n_pad
    cost = pl.CostEstimate(
        flops=14 * elems + 8 * B * n_pad,
        transcendentals=2 * elems + 3 * B * n_pad,
        bytes_accessed=4 * (2 * elems + 2 * B * n_pad),
    )

    partials = pl.pallas_call(
        kernel,
        out_shape=jax.ShapeDtypeStruct((B, n_tiles, 1, tile), jnp.float32),
        grid_spec=pltpu.PrefetchScalarGridSpec(
            num_scalar_prefetch=0,
            grid=(B, n_tiles),
            in_specs=[
                pl.BlockSpec((1, C, tile), lambda b, i: (b, 0, i)),
                pl.BlockSpec((1, C, tile), lambda b, i: (b, 0, i)),
                pl.BlockSpec((1, 1, tile), lambda b, i: (b, 0, i)),
            ],
            out_specs=pl.BlockSpec((1, 1, 1, tile), lambda b, i: (b, i, 0, 0)),
        ),
        compiler_params=pltpu.CompilerParams(
            # every (b, tile) block is independent -> both axes parallel
            # (lets v7x shard across its two TensorCores; a no-op on v5e/v6e)
            dimension_semantics=("parallel", "parallel"),
            # comfortably below v7x's 64 MiB physical VMEM, above the default
            # scoped limit so large tiles never trip it
            vmem_limit_bytes=48 * 1024 * 1024,
        ),
        cost_estimate=cost,
    )(student, teacher, lbl3)

    # tiny final cross-tile reduction + normalization by the ORIGINAL point count
    return jnp.sum(partials) / jnp.float32(N)


def _reference(student, teacher, labels, ignore_index=0):
    B, C, N = student.shape
    s = jnp.transpose(student, (0, 2, 1)).reshape(-1, C)
    t = jnp.transpose(teacher, (0, 2, 1)).reshape(-1, C)
    l = labels.reshape(-1)
    log_s = jax.nn.log_softmax(s, axis=-1)
    p_t = jax.nn.softmax(t, axis=-1)
    valid = l != ignore_index
    picked = jnp.take_along_axis(log_s, l[:, None], axis=-1)[:, 0]
    ce = -jnp.sum(jnp.where(valid, picked, 0.0))
    kl = jnp.sum(jnp.where((~valid)[:, None], p_t * (jnp.log(p_t) - log_s), 0.0))
    return (ce + kl) / N


if __name__ == "__main__":
    key = jax.random.PRNGKey(0)
    k1, k2, k3 = jax.random.split(key, 3)

    B, C, N = 2, 16, 256          # (batch, num_classes, num_points)
    student = jax.random.normal(k1, (B, C, N), dtype=jnp.float32)
    teacher = jax.random.normal(k2, (B, C, N), dtype=jnp.float32)
    labels = jax.random.randint(k3, (B, N), 0, C, dtype=jnp.int32)  # 0 == ignore_index

    loss = partial_consistency_loss(student, teacher, labels, ignore_index=0)
    loss = jax.block_until_ready(loss)

    ref = _reference(student, teacher, labels, ignore_index=0)
    # tolerance accounts for the approximate (EUP vrcp) softmax denominator
    assert jnp.allclose(loss, ref, rtol=1e-3, atol=1e-3), (loss, ref)

    print("KERNEL_OK")
</pallas_src>

<mosaic_0001>
module attributes {stable_mosaic.version = 11 : i64} {
  func.func @_loss_kernel(%arg0: i32, %arg1: i32, %arg2: memref<1x16x256xf32, #tpu.memory_space<vmem>>, %arg3: memref<1x16x256xf32, #tpu.memory_space<vmem>>, %arg4: memref<1x1x256xi32, #tpu.memory_space<vmem>>, %arg5: memref<1x1x1x256xf32, #tpu.memory_space<vmem>>) attributes {dimension_semantics = [#tpu.dimension_semantics<parallel>, #tpu.dimension_semantics<parallel>], iteration_bounds = array<i64: 2, 1>, scalar_prefetch = 0 : i64, scratch_operands = 0 : i64, tpu.core_type = #tpu.core_type<tc>, window_params = [{transform_indices = @transform_0, window_bounds = array<i64: 1, 16, 256>}, {transform_indices = @transform_1, window_bounds = array<i64: 1, 16, 256>}, {transform_indices = @transform_2, window_bounds = array<i64: 1, 1, 256>}, {transform_indices = @transform_3, window_bounds = array<i64: 1, 1, 1, 256>}]} {
    %c0 = arith.constant 0 : index
    %c0_0 = arith.constant 0 : index
    %c0_1 = arith.constant 0 : index
    %0 = vector.load %arg2[%c0, %c0_0, %c0_1] : memref<1x16x256xf32, #tpu.memory_space<vmem>>, vector<1x16x256xf32>
    %1 = vector.shape_cast %0 : vector<1x16x256xf32> to vector<16x256xf32>
    %c0_2 = arith.constant 0 : index
    %c0_3 = arith.constant 0 : index
    %c0_4 = arith.constant 0 : index
    %2 = vector.load %arg3[%c0_2, %c0_3, %c0_4] : memref<1x16x256xf32, #tpu.memory_space<vmem>>, vector<1x16x256xf32>
    %3 = vector.shape_cast %2 : vector<1x16x256xf32> to vector<16x256xf32>
    %c0_5 = arith.constant 0 : index
    %c0_6 = arith.constant 0 : index
    %c0_7 = arith.constant 0 : index
    %4 = vector.load %arg4[%c0_5, %c0_6, %c0_7] : memref<1x1x256xi32, #tpu.memory_space<vmem>>, vector<1x1x256xi32>
    %5 = vector.shape_cast %4 : vector<1x1x256xi32> to vector<1x256xi32>
    %cst = arith.constant dense<0xFF800000> : vector<256xf32>
    %6 = vector.multi_reduction <maximumf>, %1, %cst [0] : vector<16x256xf32> to vector<256xf32>
    %7 = vector.shape_cast %6 : vector<256xf32> to vector<1x256xf32>
    %8 = vector.broadcast %7 : vector<1x256xf32> to vector<16x256xf32>
    %9 = arith.subf %1, %8 : vector<16x256xf32>
    %10 = math.exp %9 : vector<16x256xf32>
    %cst_8 = arith.constant dense<0.000000e+00> : vector<256xf32>
    %11 = vector.multi_reduction <add>, %10, %cst_8 [0] : vector<16x256xf32> to vector<256xf32>
    %12 = vector.shape_cast %11 : vector<256xf32> to vector<1x256xf32>
    %13 = math.log %12 : vector<1x256xf32>
    %14 = vector.broadcast %13 : vector<1x256xf32> to vector<16x256xf32>
    %15 = arith.subf %9, %14 : vector<16x256xf32>
    %cst_9 = arith.constant dense<0xFF800000> : vector<256xf32>
    %16 = vector.multi_reduction <maximumf>, %3, %cst_9 [0] : vector<16x256xf32> to vector<256xf32>
    %17 = vector.shape_cast %16 : vector<256xf32> to vector<1x256xf32>
    %18 = vector.broadcast %17 : vector<1x256xf32> to vector<16x256xf32>
    %19 = arith.subf %3, %18 : vector<16x256xf32>
    %20 = math.exp %19 : vector<16x256xf32>
    %cst_10 = arith.constant dense<0.000000e+00> : vector<256xf32>
    %21 = vector.multi_reduction <add>, %20, %cst_10 [0] : vector<16x256xf32> to vector<256xf32>
    %22 = vector.shape_cast %21 : vector<256xf32> to vector<1x256xf32>
    %23 = tpu.reciprocal %22 {approx = true} : vector<1x256xf32> -> vector<1x256xf32>
    %24 = vector.broadcast %23 : vector<1x256xf32> to vector<16x256xf32>
    %25 = arith.mulf %20, %24 : vector<16x256xf32>
    %26 = math.log %22 : vector<1x256xf32>
    %27 = vector.broadcast %26 : vector<1x256xf32> to vector<16x256xf32>
    %28 = arith.subf %19, %27 : vector<16x256xf32>
    %c0_i32 = arith.constant 0 : i32
    %29 = vector.broadcast %c0_i32 : i32 to vector<1x256xi32>
    %30 = arith.cmpi eq, %5, %29 : vector<1x256xi32>
    %31 = tpu.iota {dimensions = array<i32: 0>} : vector<16x256xi32>
    %32 = vector.broadcast %5 : vector<1x256xi32> to vector<16x256xi32>
    %33 = arith.cmpi eq, %31, %32 : vector<16x256xi32>
    %cst_11 = arith.constant 0.000000e+00 : f32
    %34 = vector.broadcast %cst_11 : f32 to vector<16x256xf32>
    %35 = arith.subf %34, %15 : vector<16x256xf32>
    %cst_12 = arith.constant 0.000000e+00 : f32
    %36 = vector.broadcast %cst_12 : f32 to vector<16x256xf32>
    %37 = arith.select %33, %35, %36 : vector<16x256xi1>, vector<16x256xf32>
    %38 = arith.subf %28, %15 : vector<16x256xf32>
    %39 = arith.mulf %25, %38 : vector<16x256xf32>
    %40 = vector.shape_cast %30 : vector<1x256xi1> to vector<1x256xi1>
    %41 = vector.broadcast %40 : vector<1x256xi1> to vector<16x256xi1>
    %42 = arith.select %41, %39, %37 : vector<16x256xi1>, vector<16x256xf32>
    %cst_13 = arith.constant dense<0.000000e+00> : vector<256xf32>
    %43 = vector.multi_reduction <add>, %42, %cst_13 [0] : vector<16x256xf32> to vector<256xf32>
    %44 = vector.shape_cast %43 : vector<256xf32> to vector<1x256xf32>
    %45 = vector.shape_cast %44 : vector<1x256xf32> to vector<1x1x1x256xf32>
    %c0_14 = arith.constant 0 : index
    %c0_15 = arith.constant 0 : index
    %c0_16 = arith.constant 0 : index
    %c0_17 = arith.constant 0 : index
    %46 = vector.load %arg5[%c0_14, %c0_15, %c0_16, %c0_17] : memref<1x1x1x256xf32, #tpu.memory_space<vmem>>, vector<1x1x1x256xf32>
    tpu.vector_store %arg5[%c0_14, %c0_15, %c0_16, %c0_17], %45 {strides = array<i32>} : memref<1x1x1x256xf32, #tpu.memory_space<vmem>>, vector<1x1x1x256xf32>,
    return
  }
  func.func @transform_0(%arg0: i32, %arg1: i32) -> (i32, i32, i32) {
    %c0_i32 = arith.constant 0 : i32
    %c0_i32_0 = arith.constant 0 : i32
    return %arg0, %c0_i32, %arg1 : i32, i32, i32
  }
  func.func @transform_1(%arg0: i32, %arg1: i32) -> (i32, i32, i32) {
    %c0_i32 = arith.constant 0 : i32
    %c0_i32_0 = arith.constant 0 : i32
    return %arg0, %c0_i32, %arg1 : i32, i32, i32
  }
  func.func @transform_2(%arg0: i32, %arg1: i32) -> (i32, i32, i32) {
    %c0_i32 = arith.constant 0 : i32
    %c0_i32_0 = arith.constant 0 : i32
    return %arg0, %c0_i32, %arg1 : i32, i32, i32
  }
  func.func @transform_3(%arg0: i32, %arg1: i32) -> (i32, i32, i32, i32) {
    %c0_i32 = arith.constant 0 : i32
    %c0_i32_0 = arith.constant 0 : i32
    %c0_i32_1 = arith.constant 0 : i32
    return %arg0, %arg1, %c0_i32, %c0_i32_0 : i32, i32, i32, i32
  }
}

</mosaic_0001>

<llo_original>
// kernel: tpu_custom_call.1
$region0: #{tpu_custom_call.1}
  #allocation0 [shape = 'u32[]', space=smem, size = 0x4, offset = 0x4, fixed_abs, tag = 'smem constant byte address 0x4 - core index']
  #allocation1 [shape = 'u32[144,128]{1,0:T(1,128)}', space=vmem, size = 0x12000, scoped, tag = 'internal scratch']
  %s0 = inlined_call_operand.hbm [shape: f32[2,16,256], index: 0, kind: input, shape index: {}]
  %s1 = inlined_call_operand.hbm [shape: f32[2,16,256], index: 1, kind: input, shape index: {}]
  %s2 = inlined_call_operand.vmem [shape: s32[2,1,256], index: 2, kind: input, shape index: {}]
  %s3 = inlined_call_operand.hbm [shape: f32[2,1,1,256], index: 3, kind: output, shape index: {}]
  %s4 = sld [smem:[#allocation0]]
  $region53: #{tpu_custom_call.1} parent=0
    _
  %s6 = ssub.s32 1, %s4
  %s7 = scalar_select 0, %s6, %s4
  $region1: #{tpu_custom_call.1} parent=0
    #allocation2 [shape = 'u8[32768]{0}', space=vmem, size = 0x8000, scoped, tag = 'input window, operand 0']
    #allocation3 [shape = 's32[2]{0}', space=sflag, size = 0x8, scoped, tag = 'scoped memory for tpu_custom_call.1']
    #allocation4 [shape = 's32[2]{0}', space=sflag, size = 0x8, scoped, tag = 'scoped memory for tpu_custom_call.1']
    #allocation5 [shape = 'u8[32768]{0}', space=vmem, size = 0x8000, scoped, tag = 'input window, operand 1']
    #allocation6 [shape = 's32[2]{0}', space=sflag, size = 0x8, scoped, tag = 'scoped memory for tpu_custom_call.1']
    #allocation7 [shape = 'u8[2048]{0}', space=vmem, size = 0x800, scoped, tag = 'output window, operand 0']
    %8 = vsyncpa [#allocation3], 0
    %s9 = scalar_lea.sflag [#allocation3], 1
    %10 = vsyncpa %s9, 0
    %11 = vsyncpa [#allocation6], 0
    %s12 = scalar_lea.sflag [#allocation6], 1
    %13 = vsyncpa %s12, 0
    %14 = vsyncpa [#allocation4], 0
    %s15 = scalar_lea.sflag [#allocation4], 1
    %16 = vsyncpa %s15, 0
    loop: start=0, step=1, limit=4
    $region2: #{tpu_custom_call.1} parent=1 // loop_pre_header
      _
    $region3: #{tpu_custom_call.1} parent=1 // loop_header
      %s18 = sphi 0, %s22
      %p19 = scmp.ge.s32.totalorder %s18, 4
      %s25 = sphi 0, %s37
      %s26 = sphi 0, %s33
      %s27 = sphi 0, %s25
      %s28 = sphi 0, %s26
      %s29 = sphi 0, %s27
      %s30 = sphi 0, %s28
      %s42 = sphi 0, %s44
      %s45 = sphi 0, %s42
      %s46 = sphi 0, %s45
      %s62 = sphi 0, %s46
      %s70 = sphi 0, %s72
      %s73 = sphi 0, %s70
      %s74 = sphi 0, %s73
      %s90 = sphi 0, %s74
      %s98 = sphi 0, %s100
      %s101 = sphi 0, %s98
      %s102 = sphi 0, %s101
      %s118 = sphi 0, %s102
      %s126 = sphi 0, %s128
      %s129 = sphi 0, %s126
      %s130 = sphi 0, %s129
      %s146 = sphi 0, %s130
    $region4: #{tpu_custom_call.1} parent=1 // loop_header_branch
      %21 = sbr.rel (%p19) target = $region8
    $region5: #{tpu_custom_call.1} parent=1 // loop_body
      %s23 = ssub.s32 %s18, 1
      %s24 = ssub.s32 %s18, 2
      %s31 = sadd.s32 1, %s26
      %p32 = scmp.ge.s32.totalorder %s31, 1
      %s33 = scalar_select %p32, 0, %s31
      %s34 = sadd.s32 1, %s25
      %s35 = scalar_select %p32, %s34, %s25
      %p36 = scmp.ge.s32.totalorder %s35, 2
      %s37 = scalar_select %p36, 0, %s35
      %s38 = ssub.s32 %s25, %s37
      %s39 = ssub.s32 %s26, %s33
      %s40 = sor.u32 %s38, %s39
      %p41 = scmp.eq.s32.totalorder %s40, 0
      %s43 = sadd.s32 %s42, 1
      %s44 = scalar_select %p41, %s42, %s43
      %p47 = pneg %p41
      %p48 = scmp.eq.s32.totalorder %s18, 1
      %p49 = por %p47, %p48
      %p50 = scmp.ne.s32.totalorder %s42, %s45
      %p51 = scmp.eq.s32.totalorder %s18, 0
      %p52 = por %p50, %p51
      %p53 = scmp.ne.s32.totalorder %s42, %s45
      %p54 = scmp.eq.s32.totalorder %s23, 1
      %p55 = por %p53, %p54
      %p56 = scmp.ne.s32.totalorder %s45, %s46
      %p57 = scmp.eq.s32.totalorder %s23, 0
      %p58 = por %p56, %p57
      %p59 = scmp.ne.s32.totalorder %s45, %s46
      %p60 = scmp.eq.s32.totalorder %s24, 1
      %p61 = por %p59, %p60
      %p63 = scmp.ne.s32.totalorder %s46, %s62
      %p64 = scmp.eq.s32.totalorder %s24, 0
      %p65 = por %p63, %p64
      %s66 = ssub.s32 %s25, %s37
      %s67 = ssub.s32 %s26, %s33
      %s68 = sor.u32 %s66, %s67
      %p69 = scmp.eq.s32.totalorder %s68, 0
      %s71 = sadd.s32 %s70, 1
      %s72 = scalar_select %p69, %s70, %s71
      %p75 = pneg %p69
      %p76 = scmp.eq.s32.totalorder %s18, 1
      %p77 = por %p75, %p76
      %p78 = scmp.ne.s32.totalorder %s70, %s73
      %p79 = scmp.eq.s32.totalorder %s18, 0
      %p80 = por %p78, %p79
      %p81 = scmp.ne.s32.totalorder %s70, %s73
      %p82 = scmp.eq.s32.totalorder %s23, 1
      %p83 = por %p81, %p82
      %p84 = scmp.ne.s32.totalorder %s73, %s74
      %p85 = scmp.eq.s32.totalorder %s23, 0
      %p86 = por %p84, %p85
      %p87 = scmp.ne.s32.totalorder %s73, %s74
      %p88 = scmp.eq.s32.totalorder %s24, 1
      %p89 = por %p87, %p88
      %p91 = scmp.ne.s32.totalorder %s74, %s90
      %p92 = scmp.eq.s32.totalorder %s24, 0
      %p93 = por %p91, %p92
      %s94 = ssub.s32 %s25, %s37
      %s95 = ssub.s32 %s26, %s33
      %s96 = sor.u32 %s94, %s95
      %p97 = scmp.eq.s32.totalorder %s96, 0
      %s99 = sadd.s32 %s98, 1
      %s100 = scalar_select %p97, %s98, %s99
      %p103 = pneg %p97
      %p104 = scmp.eq.s32.totalorder %s18, 1
      %p105 = por %p103, %p104
      %p106 = scmp.ne.s32.totalorder %s98, %s101
      %p107 = scmp.eq.s32.totalorder %s18, 0
      %p108 = por %p106, %p107
      %p109 = scmp.ne.s32.totalorder %s98, %s101
      %p110 = scmp.eq.s32.totalorder %s23, 1
      %p111 = por %p109, %p110
      %p112 = scmp.ne.s32.totalorder %s101, %s102
      %p113 = scmp.eq.s32.totalorder %s23, 0
      %p114 = por %p112, %p113
      %p115 = scmp.ne.s32.totalorder %s101, %s102
      %p116 = scmp.eq.s32.totalorder %s24, 1
      %p117 = por %p115, %p116
      %p119 = scmp.ne.s32.totalorder %s102, %s118
      %p120 = scmp.eq.s32.totalorder %s24, 0
      %p121 = por %p119, %p120
      %s122 = ssub.s32 %s25, %s37
      %s123 = ssub.s32 %s26, %s33
      %s124 = sor.u32 %s122, %s123
      %p125 = scmp.eq.s32.totalorder %s124, 0
      %s127 = sadd.s32 %s126, 1
      %s128 = scalar_select %p125, %s126, %s127
      %p131 = pneg %p125
      %p132 = scmp.eq.s32.totalorder %s18, 1
      %p133 = por %p131, %p132
      %p134 = scmp.ne.s32.totalorder %s126, %s129
      %p135 = scmp.eq.s32.totalorder %s18, 0
      %p136 = por %p134, %p135
      %p137 = scmp.ne.s32.totalorder %s126, %s129
      %p138 = scmp.eq.s32.totalorder %s23, 1
      %p139 = por %p137, %p138
      %p140 = scmp.ne.s32.totalorder %s129, %s130
      %p141 = scmp.eq.s32.totalorder %s23, 0
      %p142 = por %p140, %p141
      %p143 = scmp.ne.s32.totalorder %s129, %s130
      %p144 = scmp.eq.s32.totalorder %s24, 1
      %p145 = por %p143, %p144
      %p147 = scmp.ne.s32.totalorder %s130, %s146
      %p148 = scmp.eq.s32.totalorder %s24, 0
      %p149 = por %p147, %p148
      %p150 = scmp.le.s32.totalorder 1, %s18
      %p151 = scmp.lt.s32.totalorder %s18, 3
      %p152 = pnand %p150, %p151
      %p153 = pneg %p152
      // Predicated region
      $region9: #{tpu_custom_call.1} parent=5 // pred_check
        _
      $region10: #{tpu_custom_call.1} parent=5 // pred_check_branch
        %155 = sbr.rel (%p152) target = $region12
      $region11: #{tpu_custom_call.1} parent=5 // pred_region
        %s156 = ssub.s32 %s18, 1
      $region12: #{tpu_custom_call.1} parent=5 // pred_fallthru
        _
      %p157 = scmp.lt.s32.totalorder %s18, 2
      // Predicated region
      $region13: #{tpu_custom_call.1} parent=5 // pred_check
        %p158 = pneg %p157
      $region14: #{tpu_custom_call.1} parent=5 // pred_check_branch
        %160 = sbr.rel (%p158) target = $region16
      $region15: #{tpu_custom_call.1} parent=5 // pred_region
        // Predicated region
        $region17: #{tpu_custom_call.1} parent=15 // pred_check
          %p161 = pneg %p52
        $region18: #{tpu_custom_call.1} parent=15 // pred_check_branch
          %163 = sbr.rel (%p161) target = $region20
        $region19: #{tpu_custom_call.1} parent=15 // pred_region
          %s164 = sand.u32 %s42, 1
          %s165 = scalar_lea.sflag [#allocation3], %s164
          %s166 = sand.u32 %s42, 1
          %s167 = smul.addr %s166, 32
          %s168 = scalar_lea.vmem [#allocation2], %s167
          %s169 = smul.u32 2, %s26
          %s171 = ssub.s32 512, 512
          %172 = vsyncadd %s165, %s171
          %s173 = smul.addr %s25, 4
          %s174 = sadd.s32 %s169, %s173
          %s175 = smul.addr %s174, 128
          %s176 = scalar_lea.hbm %s0, %s175
          %s177 = sshll.u32 %s168, 4
          %s178 = int_to_ptr.vmem [resolvable:$true] %s177
          %183 = dma.hbm_to_vmem [thread:$0]  %s176, 512, %s178, %s165, 256, 256, 16
        $region20: #{tpu_custom_call.1} parent=15 // pred_fallthru
          _
        // Predicated region
        $region21: #{tpu_custom_call.1} parent=15 // pred_check
          %p184 = pneg %p80
        $region22: #{tpu_custom_call.1} parent=15 // pred_check_branch
          %186 = sbr.rel (%p184) target = $region24
        $region23: #{tpu_custom_call.1} parent=15 // pred_region
          %s187 = sand.u32 %s70, 1
          %s188 = scalar_lea.sflag [#allocation6], %s187
          %s189 = sand.u32 %s70, 1
          %s190 = smul.addr %s189, 32
          %s191 = scalar_lea.vmem [#allocation5], %s190
          %s192 = smul.u32 2, %s26
          %s194 = ssub.s32 512, 512
          %195 = vsyncadd %s188, %s194
          %s196 = smul.addr %s25, 4
          %s197 = sadd.s32 %s192, %s196
          %s198 = smul.addr %s197, 128
          %s199 = scalar_lea.hbm %s1, %s198
          %s200 = sshll.u32 %s191, 4
          %s201 = int_to_ptr.vmem [resolvable:$true] %s200
          %206 = dma.hbm_to_vmem [thread:$0]  %s199, 512, %s201, %s188, 256, 256, 16
        $region24: #{tpu_custom_call.1} parent=15 // pred_fallthru
          _
        // Predicated region
        $region25: #{tpu_custom_call.1} parent=15 // pred_check
          %p207 = pneg %p108
        $region26: #{tpu_custom_call.1} parent=15 // pred_check_branch
          %209 = sbr.rel (%p207) target = $region28
        $region27: #{tpu_custom_call.1} parent=15 // pred_region
          %s210 = smul.u32 2, %s26
          %p211 = scmp.lt.s32.totalorder %s25, 1
          %s212 = scalar_select %p211, %s25, 1
          %p213 = scmp.lt.s32.totalorder %s210, 1
          %s214 = scalar_select %p213, %s210, 1
          %s215 = smul.addr %s212, 2
          %s216 = sadd.s32 %s214, %s215
          %s217 = scalar_lea.vmem %s2, %s216
          %s218 = smul.u32 2, %s26
        $region28: #{tpu_custom_call.1} parent=15 // pred_fallthru
          _
      $region16: #{tpu_custom_call.1} parent=5 // pred_fallthru
        _
      %p219 = scmp.le.s32.totalorder 1, %s18
      %p220 = scmp.lt.s32.totalorder %s18, 3
      %p221 = pnand %p219, %p220
      %p222 = pneg %p221
      // Predicated region
      $region29: #{tpu_custom_call.1} parent=5 // pred_check
        _
      $region30: #{tpu_custom_call.1} parent=5 // pred_check_branch
        %224 = sbr.rel (%p221) target = $region32
      $region31: #{tpu_custom_call.1} parent=5 // pred_region
        %s225 = ssub.s32 %s18, 1
        %s226 = sand.u32 %s45, 1
        %s227 = scalar_lea.sflag [#allocation3], %s226
        %s228 = sand.u32 %s45, 1
        %s229 = smul.addr %s228, 32
        %s230 = scalar_lea.vmem [#allocation2], %s229
        // Predicated region
        $region33: #{tpu_custom_call.1} parent=31 // pred_check
          %p231 = pneg %p58
        $region34: #{tpu_custom_call.1} parent=31 // pred_check_branch
          %233 = sbr.rel (%p231) target = $region36
        $region35: #{tpu_custom_call.1} parent=31 // pred_region
          %234 = dma.done %s227, 512
        $region36: #{tpu_custom_call.1} parent=31 // pred_fallthru
          _
        %s235 = sand.u32 %s73, 1
        %s236 = scalar_lea.sflag [#allocation6], %s235
        %s237 = sand.u32 %s73, 1
        %s238 = smul.addr %s237, 32
        %s239 = scalar_lea.vmem [#allocation5], %s238
        // Predicated region
        $region37: #{tpu_custom_call.1} parent=31 // pred_check
          %p240 = pneg %p86
        $region38: #{tpu_custom_call.1} parent=31 // pred_check_branch
          %242 = sbr.rel (%p240) target = $region40
        $region39: #{tpu_custom_call.1} parent=31 // pred_region
          %243 = dma.done %s236, 512
        $region40: #{tpu_custom_call.1} parent=31 // pred_fallthru
          _
        %s244 = sand.u32 %s45, 1
        %s245 = scalar_lea.sflag [#allocation3], %s244
        %s246 = sand.u32 %s45, 1
        %s247 = smul.addr %s246, 32
        %s248 = scalar_lea.vmem [#allocation2], %s247
        %p249 = pneg %p58
        %p250 = pneg %p55
        %s251 = sand.u32 %s73, 1
        %s252 = scalar_lea.sflag [#allocation6], %s251
        %s253 = sand.u32 %s73, 1
        %s254 = smul.addr %s253, 32
        %s255 = scalar_lea.vmem [#allocation5], %s254
        %p256 = pneg %p86
        %p257 = pneg %p83
        %s258 = smul.u32 2, %s28
        %p259 = scmp.lt.s32.totalorder %s27, 1
        %s260 = scalar_select %p259, %s27, 1
        %p261 = scmp.lt.s32.totalorder %s258, 1
        %s262 = scalar_select %p261, %s258, 1
        %s263 = smul.addr %s260, 2
        %s264 = sadd.s32 %s262, %s263
        %s265 = scalar_lea.vmem %s2, %s264
        %p266 = pneg %p114
        %p267 = pneg %p111
        %p268 = pneg %p142
        %p269 = pneg %p139
        %s270 = sand.u32 %s129, 1
        %s271 = scalar_lea.sflag [#allocation4], %s270
        %s272 = sand.u32 %s129, 1
        %s273 = smul.addr %s272, 2
        %s274 = scalar_lea.vmem [#allocation7], %s273
        %s275 = smul.u32 2, %s28
        %s276 = smul.u32 2, %s28
        %s277 = smul.u32 2, %s28
        %p278 = scmp.lt.s32.totalorder %s27, 1
        %s279 = scalar_select %p278, %s27, 1
        %p280 = scmp.lt.s32.totalorder %s277, 1
        %s281 = scalar_select %p280, %s277, 1
        %s282 = smul.addr %s279, 2
        %s283 = sadd.s32 %s281, %s282
        %s284 = scalar_lea.vmem %s2, %s283
        %s285 = smul.u32 2, %s28
        %v286 = vld [vmem:[%s230] sm:$0xff]
        %v287 = vld [vmem:[%s230 + $0x8] sm:$0xff]
        %v288 = vld [vmem:[%s230 + $0x10] sm:$0xff]
        %v289 = vld [vmem:[%s230 + $0x18] sm:$0xff]
        %v290 = vld [vmem:[%s239] sm:$0xff]
        %v291 = vld [vmem:[%s239 + $0x8] sm:$0xff]
        %v292 = vld [vmem:[%s239 + $0x10] sm:$0xff]
        %v293 = vld [vmem:[%s239 + $0x18] sm:$0xff]
        %v294 = vld [vmem:[%s284] sm:$0x3]
        %v295 = vmax.f32 %v286, %v288
        %v296 = vrot.slane %v295, 4
        %v297 = vmax.f32 %v295, %v296
        %v298 = vrot.slane %v297, 2
        %v299 = vmax.f32 %v297, %v298
        %v300 = vrot.slane %v299, 1
        %v301 = vmax.f32 %v299, %v300
        %v302 = vmax.f32 %v287, %v289
        %v303 = vrot.slane %v302, 4
        %v304 = vmax.f32 %v302, %v303
        %v305 = vrot.slane %v304, 2
        %v306 = vmax.f32 %v304, %v305
        %v307 = vrot.slane %v306, 1
        %v308 = vmax.f32 %v306, %v307
        %v309 = vsub.f32 %v286, %v301
        %v310 = vsub.f32 %v287, %v308
        %v311 = vsub.f32 %v288, %v301
        %v312 = vsub.f32 %v289, %v308
        %v313 = vmul.f32 %v309, 1.442695
        %v314 = vpow.pop %v313
        %v315 = vmul.f32 %v310, 1.442695
        %v316 = vpow.pop %v315
        %v317 = vmul.f32 %v311, 1.442695
        %v318 = vpow.pop %v317
        %v319 = vmul.f32 %v312, 1.442695
        %v320 = vpow.pop %v319
        %v321 = vadd.f32 %v314, %v318
        %v322 = vrot.slane %v321, 4
        %v323 = vadd.f32 %v321, %v322
        %v324 = vrot.slane %v323, 2
        %v325 = vadd.f32 %v323, %v324
        %v326 = vrot.slane %v325, 1
        %v327 = vadd.f32 %v325, %v326
        %v328 = vadd.f32 %v316, %v320
        %v329 = vrot.slane %v328, 4
        %v330 = vadd.f32 %v328, %v329
        %v331 = vrot.slane %v330, 2
        %v332 = vadd.f32 %v330, %v331
        %v333 = vrot.slane %v332, 1
        %v334 = vadd.f32 %v332, %v333
        %v335 = vlog2.pop %v327
        %v336 = vmul.f32 %v335, 0.6931472
        %v337 = vlog2.pop %v334
        %v338 = vmul.f32 %v337, 0.6931472
        %v339 = vsub.f32 %v309, %v336
        %v340 = vsub.f32 %v310, %v338
        %v341 = vsub.f32 %v311, %v336
        %v342 = vsub.f32 %v312, %v338
        %v343 = vmax.f32 %v290, %v292
        %v344 = vrot.slane %v343, 4
        %v345 = vmax.f32 %v343, %v344
        %v346 = vrot.slane %v345, 2
        %v347 = vmax.f32 %v345, %v346
        %v348 = vrot.slane %v347, 1
        %v349 = vmax.f32 %v347, %v348
        %v350 = vmax.f32 %v291, %v293
        %v351 = vrot.slane %v350, 4
        %v352 = vmax.f32 %v350, %v351
        %v353 = vrot.slane %v352, 2
        %v354 = vmax.f32 %v352, %v353
        %v355 = vrot.slane %v354, 1
        %v356 = vmax.f32 %v354, %v355
        %v357 = vsub.f32 %v290, %v349
        %v358 = vsub.f32 %v291, %v356
        %v359 = vsub.f32 %v292, %v349
        %v360 = vsub.f32 %v293, %v356
        %v361 = vmul.f32 %v357, 1.442695
        %v362 = vpow.pop %v361
        %v363 = vmul.f32 %v358, 1.442695
        %v364 = vpow.pop %v363
        %v365 = vmul.f32 %v359, 1.442695
        %v366 = vpow.pop %v365
        %v367 = vmul.f32 %v360, 1.442695
        %v368 = vpow.pop %v367
        %v369 = vadd.f32 %v362, %v366
        %v370 = vrot.slane %v369, 4
        %v371 = vadd.f32 %v369, %v370
        %v372 = vrot.slane %v371, 2
        %v373 = vadd.f32 %v371, %v372
        %v374 = vrot.slane %v373, 1
        %v375 = vadd.f32 %v373, %v374
        %v376 = vadd.f32 %v364, %v368
        %v377 = vrot.slane %v376, 4
        %v378 = vadd.f32 %v376, %v377
        %v379 = vrot.slane %v378, 2
        %v380 = vadd.f32 %v378, %v379
        %v381 = vrot.slane %v380, 1
        %v382 = vadd.f32 %v380, %v381
        %v383 = vrcp.pop %v375
        %v384 = vrcp.pop %v382
        %v385 = vmul.f32 %v362, %v383
        %v386 = vmul.f32 %v364, %v384
        %v387 = vmul.f32 %v366, %v383
        %v388 = vmul.f32 %v368, %v384
        %v389 = vlog2.pop %v375
        %v390 = vmul.f32 %v389, 0.6931472
        %v391 = vlog2.pop %v382
        %v392 = vmul.f32 %v391, 0.6931472
        %v393 = vsub.f32 %v357, %v390
        %v394 = vsub.f32 %v358, %v392
        %v395 = vsub.f32 %v359, %v390
        %v396 = vsub.f32 %v360, %v392
        %vm397 = vcmp.eq.s32.totalorder %v294, 0
        %v398 = vlaneseq
        %v399 = vshrl.u32 %v398, 7
        %v400 = vadd.s32 %v399, 8
        %v401 = vlaneseq
        %v402 = vshrl.u32 %v401, 7
        %v403 = vsub.s32 0, %v402
        %v404 = vrot.slane %v294, %v403
        %v405 = vlaneseq
        %v406 = vshrl.u32 %v405, 7
        %v407 = vsub.s32 1, %v406
        %v408 = vrot.slane %v294, %v407
        %vm409 = vcmp.eq.s32.totalorder %v399, %v404
        %vm410 = vcmp.eq.s32.totalorder %v399, %v408
        %vm411 = vcmp.eq.s32.totalorder %v400, %v404
        %vm412 = vcmp.eq.s32.totalorder %v400, %v408
        %v413 = vsub.f32 0.0, %v339
        %v414 = vsub.f32 0.0, %v340
        %v415 = vsub.f32 0.0, %v341
        %v416 = vsub.f32 0.0, %v342
        %v417 = vsel %vm409, %v413, 0.0
        %v418 = vsel %vm410, %v414, 0.0
        %v419 = vsel %vm411, %v415, 0.0
        %v420 = vsel %vm412, %v416, 0.0
        %v421 = vsub.f32 %v393, %v339
        %v422 = vsub.f32 %v394, %v340
        %v423 = vsub.f32 %v395, %v341
        %v424 = vsub.f32 %v396, %v342
        %v425 = vmul.f32 %v385, %v421
        %v426 = vmul.f32 %v386, %v422
        %v427 = vmul.f32 %v387, %v423
        %v428 = vmul.f32 %v388, %v424
        %v429 = vsel %vm397, 1, 0
        %v430 = vlaneseq
        %v431 = vshrl.u32 %v430, 7
        %v432 = vsub.s32 0, %v431
        %v433 = vrot.slane %v429, %v432
        %v434 = vlaneseq
        %v435 = vshrl.u32 %v434, 7
        %v436 = vsub.s32 1, %v435
        %v437 = vrot.slane %v429, %v436
        %vm438 = vcmp.eq.s32.totalorder %v433, 1
        %vm439 = vcmp.eq.s32.totalorder %v437, 1
        %v440 = vsel %vm438, %v425, %v417
        %v441 = vsel %vm439, %v426, %v418
        %v442 = vsel %vm438, %v427, %v419
        %v443 = vsel %vm439, %v428, %v420
        %v444 = vadd.f32 %v440, %v442
        %v445 = vrot.slane %v444, 4
        %v446 = vadd.f32 %v444, %v445
        %v447 = vrot.slane %v446, 2
        %v448 = vadd.f32 %v446, %v447
        %v449 = vrot.slane %v448, 1
        %v450 = vadd.f32 %v448, %v449
        %v451 = vadd.f32 %v441, %v443
        %v452 = vrot.slane %v451, 4
        %v453 = vadd.f32 %v451, %v452
        %v454 = vrot.slane %v453, 2
        %v455 = vadd.f32 %v453, %v454
        %v456 = vrot.slane %v455, 1
        %v457 = vadd.f32 %v455, %v456
        %v460 = vcombine.low %v450, %v457
        %v462 = vunpack.c.l.s4 1966171168
        %v463 = vunpack.c.0.s8 %v462
        %v464 = vlaneseq
        %v465 = vshrl.u32 %v464, 7
        %v466 = vsub.s32 %v463, %v465
        %v467 = vrot.slane %v460, %v466
        %v469 = vunpack.c.l.s4 1966171168
        %v470 = vunpack.c.0.s8 %v469
        %v471 = vlaneseq
        %v472 = vshrl.u32 %v471, 7
        %v473 = vsub.s32 %v470, %v472
        %v474 = vrot.slane %v467, %v473
        %v476 = vlaneseq
        %vm477 = vcmp.ge.s32.totalorder %v476, 0
        %vm478 = vcmp.lt.s32.totalorder %v476, 256
        %vm479 = vmand %vm477, %vm478
        %480 = vst.msk [vmem:[%s274] sm:$0x3] %vm479, %v474
        %s481 = sand.u32 %s129, 1
        %s482 = scalar_lea.sflag [#allocation4], %s481
        %s483 = sand.u32 %s129, 1
        %s484 = smul.addr %s483, 2
        %s485 = scalar_lea.vmem [#allocation7], %s484
        // Predicated region
        $region41: #{tpu_custom_call.1} parent=31 // pred_check
          %p486 = pneg %p139
        $region42: #{tpu_custom_call.1} parent=31 // pred_check_branch
          %488 = sbr.rel (%p486) target = $region44
        $region43: #{tpu_custom_call.1} parent=31 // pred_region
          %s490 = ssub.s32 32, 32
          %491 = vsyncadd %s482, %s490
          %s492 = smul.addr %s28, 2
          %s493 = smul.addr %s27, 2
          %s494 = sadd.s32 %s492, %s493
          %s495 = smul.addr %s494, 16
          %s496 = scalar_lea.hbm %s3, %s495
          %s498 = sshll.u32 %s485, 4
          %s499 = int_to_ptr.vmem [resolvable:$true] %s498
          %501 = dma.vmem_to_hbm [thread:$0]  %s499, 32, %s496, %s482
        $region44: #{tpu_custom_call.1} parent=31 // pred_fallthru
          _
      $region32: #{tpu_custom_call.1} parent=5 // pred_fallthru
        _
      %p502 = scmp.le.s32.totalorder 2, %s18
      // Predicated region
      $region45: #{tpu_custom_call.1} parent=5 // pred_check
        %p503 = pneg %p502
      $region46: #{tpu_custom_call.1} parent=5 // pred_check_branch
        %505 = sbr.rel (%p503) target = $region48
      $region47: #{tpu_custom_call.1} parent=5 // pred_region
        %s506 = ssub.s32 %s18, 2
        // Predicated region
        $region49: #{tpu_custom_call.1} parent=47 // pred_check
          %p507 = pneg %p145
        $region50: #{tpu_custom_call.1} parent=47 // pred_check_branch
          %509 = sbr.rel (%p507) target = $region52
        $region51: #{tpu_custom_call.1} parent=47 // pred_region
          %s510 = sand.u32 %s130, 1
          %s511 = scalar_lea.sflag [#allocation4], %s510
          %s512 = sand.u32 %s130, 1
          %s513 = smul.addr %s512, 2
          %s514 = scalar_lea.vmem [#allocation7], %s513
          %515 = dma.done %s511, 32
        $region52: #{tpu_custom_call.1} parent=47 // pred_fallthru
          _
      $region48: #{tpu_custom_call.1} parent=5 // pred_fallthru
        _
    $region6: #{tpu_custom_call.1} parent=1 // loop_footer
      %s22 = sadd.s32 1, %s18
    $region7: #{tpu_custom_call.1} parent=1 // loop_footer_branch
      %17 = sbr.rel target = $region3
    $region8: #{tpu_custom_call.1} parent=1 // loop_exit
      _
    %516 = vsyncpa [#allocation3], 1
    %s517 = scalar_lea.sflag [#allocation3], 1
    %518 = vsyncpa %s517, 1
    %519 = vsyncpa [#allocation6], 1
    %s520 = scalar_lea.sflag [#allocation6], 1
    %521 = vsyncpa %s520, 1
    %522 = vsyncpa [#allocation4], 1
    %s523 = scalar_lea.sflag [#allocation4], 1
    %524 = vsyncpa %s523, 1

</llo_original>
